<compile_context>
chip_gen: v7x
topology: tpu7x:2x2x1
jax: 0.10.0
libtpu: 0.0.40
codegen_flags: <defaults>
</compile_context>

<pallas_src>
import functools

import jax
import jax.numpy as jnp
from jax.experimental import pallas as pl
from jax.experimental.pallas import tpu as pltpu


_COMPILER_PARAMS = pltpu.CompilerParams(
    dimension_semantics=("parallel",),
    vmem_limit_bytes=32 * 1024 * 1024,
)


# ----------------------------- Pallas kernels ------------------------------ #

def _conv3x3_kernel(*refs, H, W, C_list, relu):
    """3x3 'same' conv (+ folded BN affine) (+ ReLU) for one batch image.

    refs = (*x_refs, w_ref, shift_ref, o_ref, xpad_ref)
      x_refs[i]: (1, H, W, C_i)   input maps (concat is fused in-kernel)
      w_ref:     (9*sum(C), Cout) bf16, BN scale folded, rows (dy*3+dx)*C + ci
      shift_ref: (1, Cout) f32    folded conv-bias + BN shift
      o_ref:     (1, H, W, Cout)
      xpad_ref:  (H+2, W+2, Ctot) f32 VMEM scratch (halo-padded input)
    """
    n_in = len(C_list)
    x_refs = refs[:n_in]
    w_ref, shift_ref, o_ref, xpad_ref = refs[n_in:n_in + 4]
    Ctot = sum(C_list)
    Cout = o_ref.shape[-1]

    # Zero the halo border once; it is never overwritten afterwards.
    @pl.when(pl.program_id(0) == 0)
    def _():
        xpad_ref[...] = jnp.zeros(xpad_ref.shape, xpad_ref.dtype)

    # Fused concat: each input fills its channel range of the interior.
    off = 0
    for x_ref, c in zip(x_refs, C_list):
        xpad_ref[1:H + 1, 1:W + 1, off:off + c] = x_ref[0].astype(xpad_ref.dtype)
        off += c

    # im2col once -> a single bf16 MXU matmul with K = 9*Ctot.
    cols = []
    for dy in range(3):
        for dx in range(3):
            cols.append(xpad_ref[dy:dy + H, dx:dx + W, :].reshape(H * W, Ctot))
    patches = jnp.concatenate(cols, axis=-1).astype(jnp.bfloat16)

    acc = jnp.dot(patches, w_ref[...], preferred_element_type=jnp.float32)
    y = acc + shift_ref[...]                       # f32 epilogue
    if relu:
        y = jnp.maximum(y, 0.0)
    o_ref[0] = y.reshape(H, W, Cout).astype(o_ref.dtype)


def _deconv2x2_kernel(x_ref, w_ref, b_ref, o_ref, *, H, W, Cout):
    """ConvTranspose2d(k=2, s=2) for one batch image, pixel shuffle fused.

      x_ref: (1, H, W, Cin)
      w_ref: (Cin, 4*Cout) bf16, lane order (ki, kj, c)
      b_ref: (1, 4*Cout) f32
      o_ref: (1, H, 2, W, 2*Cout) -- contiguously reshapes to (2H,2W,Cout).
    """
    Cin = x_ref.shape[-1]
    x = x_ref[0].reshape(H * W, Cin).astype(jnp.bfloat16)
    y = jnp.dot(x, w_ref[...], preferred_element_type=jnp.float32) + b_ref[...]
    for ki in range(2):
        o_ref[0, :, ki, :, :] = (
            y[:, ki * 2 * Cout:(ki + 1) * 2 * Cout]
            .reshape(H, W, 2 * Cout)
            .astype(o_ref.dtype))


# ------------------------------ Kernel wrappers ----------------------------- #

def conv3x3_bn_relu(inputs, w, shift, relu=True):
    """inputs: list of NHWC arrays (channel-concat fused); w: (9*Ctot, Cout) bf16."""
    N, H, W = inputs[0].shape[:3]
    C_list = tuple(int(t.shape[3]) for t in inputs)
    Ctot = sum(C_list)
    Cout = int(w.shape[1])
    assert w.shape[0] == 9 * Ctot, (w.shape, C_list)

    kernel = functools.partial(_conv3x3_kernel, H=H, W=W, C_list=C_list, relu=relu)
    in_specs = [pl.BlockSpec((1, H, W, c), lambda n: (n, 0, 0, 0)) for c in C_list]
    in_specs += [pl.BlockSpec((9 * Ctot, Cout), lambda n: (0, 0)),
                 pl.BlockSpec((1, Cout), lambda n: (0, 0))]
    return pl.pallas_call(
        kernel,
        out_shape=jax.ShapeDtypeStruct((N, H, W, Cout), jnp.float32),
        grid=(N,),
        in_specs=in_specs,
        out_specs=pl.BlockSpec((1, H, W, Cout), lambda n: (n, 0, 0, 0)),
        scratch_shapes=[pltpu.VMEM((H + 2, W + 2, Ctot), jnp.float32)],
        compiler_params=_COMPILER_PARAMS,
    )(*inputs, w, shift)


def deconv2x2_stride2(x, w_packed, b_packed):
    """ConvTranspose2d(Cin, Cout, kernel_size=2, stride=2), NHWC in/out."""
    N, H, W, Cin = x.shape
    Cout = int(w_packed.shape[1]) // 4
    kernel = functools.partial(_deconv2x2_kernel, H=H, W=W, Cout=Cout)
    y = pl.pallas_call(
        kernel,
        out_shape=jax.ShapeDtypeStruct((N, H, 2, W, 2 * Cout), jnp.float32),
        grid=(N,),
        in_specs=[pl.BlockSpec((1, H, W, Cin), lambda n: (n, 0, 0, 0)),
                  pl.BlockSpec((Cin, 4 * Cout), lambda n: (0, 0)),
                  pl.BlockSpec((1, 4 * Cout), lambda n: (0, 0))],
        out_specs=pl.BlockSpec((1, H, 2, W, 2 * Cout),
                               lambda n: (n, 0, 0, 0, 0)),
        compiler_params=_COMPILER_PARAMS,
    )(x, w_packed, b_packed)
    # (N, H, 2, W, 2*Cout) -> (N, 2H, 2W, Cout) is a free contiguous reshape.
    return y.reshape(N, 2 * H, 2 * W, Cout)


# ------------------------------- Model glue --------------------------------- #

def _normal(key, shape, std=0.1):
    return std * jax.random.normal(key, shape, jnp.float32)


def make_conv_bn(key, cin, cout, eps=1e-5):
    """Conv2d(cin,cout,3,padding=1) + BatchNorm2d(cout) (eval), BN folded in."""
    k = jax.random.split(key, 6)
    w = _normal(k[0], (cout, cin, 3, 3))          # torch layout (Cout,Cin,kH,kW)
    b = _normal(k[1], (cout,))
    gamma = 1.0 + _normal(k[2], (cout,))
    beta = _normal(k[3], (cout,))
    running_mean = _normal(k[4], (cout,))
    running_var = 1.0 + 0.1 * jnp.abs(jax.random.normal(k[5], (cout,)))
    scale = gamma / jnp.sqrt(running_var + eps)
    shift = beta - running_mean * scale
    w_k = jnp.transpose(w, (2, 3, 1, 0)).reshape(9 * cin, cout)
    w_folded = (w_k * scale[None, :]).astype(jnp.bfloat16)     # fold BN scale
    shift_total = (b * scale + shift).reshape(1, cout).astype(jnp.float32)
    return (w_folded, shift_total)


def make_up_params(key, in_ch, out_ch):
    """Parameters for Up(in_ch, out_ch, up_method='conv', norm='bn')."""
    k = jax.random.split(key, 6)
    # ConvTranspose2d(in_ch, in_ch, 2, 2): torch weight (Cin, Cout=Cin, 2, 2)
    wt = _normal(k[0], (in_ch, in_ch, 2, 2))
    bt = _normal(k[1], (in_ch,))
    w_packed = jnp.transpose(wt, (0, 2, 3, 1)).reshape(in_ch, 4 * in_ch)
    w_packed = w_packed.astype(jnp.bfloat16)
    b_packed = jnp.tile(bt, (4,)).reshape(1, 4 * in_ch).astype(jnp.float32)
    conv_up = (make_conv_bn(k[2], 2 * in_ch, out_ch),
               make_conv_bn(k[3], out_ch, out_ch))
    conv = (make_conv_bn(k[4], in_ch, out_ch),
            make_conv_bn(k[5], out_ch, out_ch))
    return dict(up_w=w_packed, up_b=b_packed, conv_up=conv_up, conv=conv)


def make_unet_core_params(key, out_channels, skip_dims):
    keys = jax.random.split(key, len(skip_dims) + 2)
    ups = []
    for i in range(1, len(skip_dims)):
        ups.append(make_up_params(keys[i - 1], skip_dims[i - 1], skip_dims[i]))
    ups.append(make_up_params(keys[len(skip_dims) - 1],
                              skip_dims[-1], skip_dims[-1] // 2))
    kf = jax.random.split(keys[-1], 2)
    c_in = skip_dims[-1] // 2
    wf = _normal(kf[0], (out_channels, c_in, 3, 3))
    bf = _normal(kf[1], (out_channels,))
    wf_k = jnp.transpose(wf, (2, 3, 1, 0)).reshape(9 * c_in, out_channels)
    return dict(ups=ups,
                final=(wf_k.astype(jnp.bfloat16),
                       bf.reshape(1, out_channels).astype(jnp.float32)))


def up_forward(p, x, x2, concat=True, is_up=True):
    """Up.forward in NHWC (skip-concat fused into the first conv)."""
    if is_up:
        x = deconv2x2_stride2(x, p['up_w'], p['up_b'])
    if concat:
        h2, w2 = x2.shape[1], x2.shape[2]
        h1, w1 = x.shape[1], x.shape[2]
        dH, dW = h2 - h1, w2 - w1
        if dH != 0 or dW != 0:          # no-op for power-of-two UNet shapes
            x = jnp.pad(x, ((0, 0),
                            (dH // 2, dH - dH // 2),
                            (dW // 2, dW - dW // 2),
                            (0, 0)))
        (w0, s0), (w1_, s1) = p['conv_up']
        x = conv3x3_bn_relu([x, x2], w0, s0, relu=True)   # fused concat
        x = conv3x3_bn_relu([x], w1_, s1, relu=True)
    else:
        for (w, s) in p['conv']:
            x = conv3x3_bn_relu([x], w, s, relu=True)
    return x


def unet_core_forward(params, x, skip_connections):
    """UNetCore.forward in NHWC (skip consumption order matches PyTorch)."""
    conn_idx = 0
    for up_p in params['ups']:
        skip = skip_connections[conn_idx]
        same_spatial = (x.shape[1] * 2 == skip.shape[1]
                        and x.shape[2] * 2 == skip.shape[2])
        same_ch = (x.shape[3] == skip.shape[3])
        if same_spatial and same_ch:
            x = up_forward(up_p, x, skip, concat=True, is_up=True)
            conn_idx += 1
        elif same_spatial and not same_ch:
            x = up_forward(up_p, x, None, concat=False, is_up=False)
        else:
            x = up_forward(up_p, x, None, concat=False, is_up=False)
            conn_idx += 1
    # final: Conv2d(skip_dims[-1]//2, out_channels, 3, padding=1) + ReLU (no BN)
    wf, shift_f = params['final']
    x = conv3x3_bn_relu([x], wf, shift_f, relu=True)
    return x


# ---------------------------------- Main ------------------------------------ #

if __name__ == "__main__":
    key = jax.random.PRNGKey(0)
    k_param, k_x, k_s0, k_s1 = jax.random.split(key, 4)

    skip_dims = [8, 4]
    out_channels = 3
    params = make_unet_core_params(k_param, out_channels, skip_dims)

    # Inputs in PyTorch NCHW convention, then permuted to NHWC for the kernels.
    x_nchw = jax.random.normal(k_x, (2, skip_dims[0], 8, 8), jnp.float32)
    skip0_nchw = jax.random.normal(k_s0, (2, skip_dims[0], 16, 16), jnp.float32)
    skip1_nchw = jax.random.normal(k_s1, (2, skip_dims[1], 32, 32), jnp.float32)

    to_nhwc = lambda t: jnp.transpose(t, (0, 2, 3, 1))
    x = to_nhwc(x_nchw)
    skips = [to_nhwc(skip0_nchw), to_nhwc(skip1_nchw)]

    out = unet_core_forward(params, x, skips)
    out = jax.block_until_ready(out)
    assert out.shape == (2, 32, 32, out_channels), out.shape
    print("KERNEL_OK")
</pallas_src>

<mosaic_0001>
module attributes {stable_mosaic.version = 11 : i64} {
  func.func @_deconv2x2_kernel(%arg0: i32, %arg1: memref<1x8x8x8xf32, #tpu.memory_space<vmem>>, %arg2: memref<8x32xbf16, #tpu.memory_space<vmem>>, %arg3: memref<1x32xf32, #tpu.memory_space<vmem>>, %arg4: memref<1x8x2x8x16xf32, #tpu.memory_space<vmem>>) attributes {dimension_semantics = [#tpu.dimension_semantics<parallel>], iteration_bounds = array<i64: 2>, scalar_prefetch = 0 : i64, scratch_operands = 0 : i64, tpu.core_type = #tpu.core_type<tc>, window_params = [{transform_indices = @transform_0, window_bounds = array<i64: 1, 8, 8, 8>}, {pipeline_mode = #tpu.pipeline_mode<synchronous>, transform_indices = @transform_1, window_bounds = array<i64: 8, 32>}, {pipeline_mode = #tpu.pipeline_mode<synchronous>, transform_indices = @transform_2, window_bounds = array<i64: 1, 32>}, {transform_indices = @transform_3, window_bounds = array<i64: 1, 8, 2, 8, 16>}]} {
    %c0 = arith.constant 0 : index
    %c0_0 = arith.constant 0 : index
    %c0_1 = arith.constant 0 : index
    %c0_2 = arith.constant 0 : index
    %0 = vector.load %arg1[%c0, %c0_0, %c0_1, %c0_2] : memref<1x8x8x8xf32, #tpu.memory_space<vmem>>, vector<1x8x8x8xf32>
    %1 = vector.shape_cast %0 : vector<1x8x8x8xf32> to vector<8x8x8xf32>
    %2 = vector.shape_cast %1 : vector<8x8x8xf32> to vector<64x8xf32>
    %3 = arith.truncf %2 : vector<64x8xf32> to vector<64x8xbf16>
    %c0_3 = arith.constant 0 : index
    %c0_4 = arith.constant 0 : index
    %4 = vector.load %arg2[%c0_3, %c0_4] : memref<8x32xbf16, #tpu.memory_space<vmem>>, vector<8x32xbf16>
    %cst = arith.constant dense<0.000000e+00> : vector<64x32xf32>
    %5 = tpu.matmul %3, %4, %cst {dimension_numbers = #tpu.dot_dimension_numbers<[1], [0], [0], [1], [0, 0, 1, 1], [], []>} : vector<64x8xbf16>, vector<8x32xbf16>, vector<64x32xf32> -> vector<64x32xf32>
    %c0_5 = arith.constant 0 : index
    %c0_6 = arith.constant 0 : index
    %6 = vector.load %arg3[%c0_5, %c0_6] : memref<1x32xf32, #tpu.memory_space<vmem>>, vector<1x32xf32>
    %7 = vector.broadcast %6 : vector<1x32xf32> to vector<64x32xf32>
    %8 = arith.addf %5, %7 : vector<64x32xf32>
    %9 = vector.extract_strided_slice %8 {offsets = [0, 0], sizes = [64, 16], strides = [1, 1]} : vector<64x32xf32> to vector<64x16xf32>
    %10 = vector.shape_cast %9 : vector<64x16xf32> to vector<8x8x16xf32>
    %c0_7 = arith.constant 0 : index
    %c0_8 = arith.constant 0 : index
    %c0_9 = arith.constant 0 : index
    %c0_10 = arith.constant 0 : index
    %c0_11 = arith.constant 0 : index
    %11 = vector.load %arg4[%c0_7, %c0_8, %c0_9, %c0_10, %c0_11] : memref<1x8x2x8x16xf32, #tpu.memory_space<vmem>>, vector<1x8x1x8x16xf32>
    %12 = vector.shape_cast %11 : vector<1x8x1x8x16xf32> to vector<8x8x16xf32>
    %13 = vector.shape_cast %10 : vector<8x8x16xf32> to vector<1x8x1x8x16xf32>
    tpu.vector_store %arg4[%c0_7, %c0_8, %c0_9, %c0_10, %c0_11], %13 {strides = array<i32>} : memref<1x8x2x8x16xf32, #tpu.memory_space<vmem>>, vector<1x8x1x8x16xf32>,
    %14 = vector.extract_strided_slice %8 {offsets = [0, 16], sizes = [64, 16], strides = [1, 1]} : vector<64x32xf32> to vector<64x16xf32>
    %15 = vector.shape_cast %14 : vector<64x16xf32> to vector<8x8x16xf32>
    %c0_12 = arith.constant 0 : index
    %c0_13 = arith.constant 0 : index
    %c1 = arith.constant 1 : index
    %c0_14 = arith.constant 0 : index
    %c0_15 = arith.constant 0 : index
    %16 = vector.load %arg4[%c0_12, %c0_13, %c1, %c0_14, %c0_15] : memref<1x8x2x8x16xf32, #tpu.memory_space<vmem>>, vector<1x8x1x8x16xf32>
    %17 = vector.shape_cast %16 : vector<1x8x1x8x16xf32> to vector<8x8x16xf32>
    %18 = vector.shape_cast %15 : vector<8x8x16xf32> to vector<1x8x1x8x16xf32>
    tpu.vector_store %arg4[%c0_12, %c0_13, %c1, %c0_14, %c0_15], %18 {strides = array<i32>} : memref<1x8x2x8x16xf32, #tpu.memory_space<vmem>>, vector<1x8x1x8x16xf32>,
    return
  }
  func.func @transform_0(%arg0: i32) -> (i32, i32, i32, i32) {
    %c0_i32 = arith.constant 0 : i32
    %c0_i32_0 = arith.constant 0 : i32
    %c0_i32_1 = arith.constant 0 : i32
    %c0_i32_2 = arith.constant 0 : i32
    return %arg0, %c0_i32, %c0_i32_0, %c0_i32_1 : i32, i32, i32, i32
  }
  func.func @transform_1(%arg0: i32) -> (i32, i32) {
    %c0_i32 = arith.constant 0 : i32
    %c0_i32_0 = arith.constant 0 : i32
    %c0_i32_1 = arith.constant 0 : i32
    return %c0_i32, %c0_i32_0 : i32, i32
  }
  func.func @transform_2(%arg0: i32) -> (i32, i32) {
    %c0_i32 = arith.constant 0 : i32
    %c0_i32_0 = arith.constant 0 : i32
    %c0_i32_1 = arith.constant 0 : i32
    return %c0_i32, %c0_i32_0 : i32, i32
  }
  func.func @transform_3(%arg0: i32) -> (i32, i32, i32, i32, i32) {
    %c0_i32 = arith.constant 0 : i32
    %c0_i32_0 = arith.constant 0 : i32
    %c0_i32_1 = arith.constant 0 : i32
    %c0_i32_2 = arith.constant 0 : i32
    %c0_i32_3 = arith.constant 0 : i32
    return %arg0, %c0_i32, %c0_i32_0, %c0_i32_1, %c0_i32_2 : i32, i32, i32, i32, i32
  }
}

</mosaic_0001>

<llo_original>
// kernel: tpu_custom_call.1
$region0: #{tpu_custom_call.1}
  #allocation0 [shape = 'u32[]', space=smem, size = 0x4, offset = 0x4, fixed_abs, tag = 'smem constant byte address 0x4 - core index']
  #allocation1 [shape = 'u32[144,128]{1,0:T(1,128)}', space=vmem, size = 0x12000, scoped, tag = 'internal scratch']
  %s0 = inlined_call_operand.hbm [shape: f32[2,8,8,8], index: 0, kind: input, shape index: {}]
  %s1 = inlined_call_operand.hbm [shape: bf16[8,32], index: 1, kind: input, shape index: {}]
  %s2 = inlined_call_operand.vmem [shape: f32[1,32], index: 2, kind: input, shape index: {}]
  %s3 = inlined_call_operand.hbm [shape: f32[2,8,2,8,16], index: 3, kind: output, shape index: {}]
  %s4 = sld [smem:[#allocation0]]
  $region53: #{tpu_custom_call.1} parent=0
    _
  %s6 = ssub.s32 1, %s4
  %s7 = scalar_select 0, %s6, %s4
  $region1: #{tpu_custom_call.1} parent=0
    #allocation2 [shape = 'u8[65536]{0}', space=vmem, size = 0x10000, scoped, tag = 'input window, operand 0']
    #allocation3 [shape = 's32[2]{0}', space=sflag, size = 0x8, scoped, tag = 'scoped memory for tpu_custom_call.1']
    #allocation4 [shape = 's32[2]{0}', space=sflag, size = 0x8, scoped, tag = 'scoped memory for tpu_custom_call.1']
    #allocation5 [shape = 'u8[2048]{0}', space=vmem, size = 0x800, scoped, tag = 'input window, operand 1, single buffered']
    #allocation6 [shape = 's32[1]{0}', space=sflag, size = 0x4, scoped, tag = 'scoped memory for tpu_custom_call.1']
    #allocation7 [shape = 'u8[131072]{0}', space=vmem, size = 0x20000, scoped, tag = 'output window, operand 0']
    %8 = vsyncpa [#allocation3], 0
    %s9 = scalar_lea.sflag [#allocation3], 1
    %10 = vsyncpa %s9, 0
    %11 = vsyncpa [#allocation6], 0
    %12 = vsyncpa [#allocation4], 0
    %s13 = scalar_lea.sflag [#allocation4], 1
    %14 = vsyncpa %s13, 0
    loop: start=0, step=1, limit=4
    $region2: #{tpu_custom_call.1} parent=1 // loop_pre_header
      _
    $region3: #{tpu_custom_call.1} parent=1 // loop_header
      %s16 = sphi 0, %s20
      %p17 = scmp.ge.s32.totalorder %s16, 4
      %s26 = sphi 0, %s28
      %s29 = sphi 0, %s26
      %s30 = sphi 0, %s29
      %s46 = sphi 0, %s30
      %s50 = sphi 0, %s50
      %s52 = sphi 0, %s50
      %s53 = sphi 0, %s52
      %s67 = sphi 0, %s53
      %s71 = sphi 0, %s71
      %s73 = sphi 0, %s71
      %s74 = sphi 0, %s73
      %s88 = sphi 0, %s74
      %s94 = sphi 0, %s96
      %s97 = sphi 0, %s94
      %s98 = sphi 0, %s97
      %s114 = sphi 0, %s98
    $region4: #{tpu_custom_call.1} parent=1 // loop_header_branch
      %19 = sbr.rel (%p17) target = $region8
    $region5: #{tpu_custom_call.1} parent=1 // loop_body
      %s21 = ssub.s32 %s16, 1
      %s22 = ssub.s32 %s16, 2
      %s23 = sadd.s32 %s16, 1
      %s24 = ssub.s32 %s16, %s23
      %p25 = scmp.eq.s32.totalorder %s24, 0
      %s27 = sadd.s32 %s26, 1
      %s28 = scalar_select %p25, %s26, %s27
      %p31 = pneg %p25
      %p32 = scmp.eq.s32.totalorder %s16, 1
      %p33 = por %p31, %p32
      %p34 = scmp.ne.s32.totalorder %s26, %s29
      %p35 = scmp.eq.s32.totalorder %s16, 0
      %p36 = por %p34, %p35
      %p37 = scmp.ne.s32.totalorder %s26, %s29
      %p38 = scmp.eq.s32.totalorder %s21, 1
      %p39 = por %p37, %p38
      %p40 = scmp.ne.s32.totalorder %s29, %s30
      %p41 = scmp.eq.s32.totalorder %s21, 0
      %p42 = por %p40, %p41
      %p43 = scmp.ne.s32.totalorder %s29, %s30
      %p44 = scmp.eq.s32.totalorder %s22, 1
      %p45 = por %p43, %p44
      %p47 = scmp.ne.s32.totalorder %s30, %s46
      %p48 = scmp.eq.s32.totalorder %s22, 0
      %p49 = por %p47, %p48
      %s51 = sadd.s32 %s50, 1
      %p54 = scmp.eq.s32.totalorder %s16, 1
      %p55 = scmp.ne.s32.totalorder %s50, %s52
      %p56 = scmp.eq.s32.totalorder %s16, 0
      %p57 = por %p55, %p56
      %p58 = scmp.ne.s32.totalorder %s50, %s52
      %p59 = scmp.eq.s32.totalorder %s21, 1
      %p60 = por %p58, %p59
      %p61 = scmp.ne.s32.totalorder %s52, %s53
      %p62 = scmp.eq.s32.totalorder %s21, 0
      %p63 = por %p61, %p62
      %p64 = scmp.ne.s32.totalorder %s52, %s53
      %p65 = scmp.eq.s32.totalorder %s22, 1
      %p66 = por %p64, %p65
      %p68 = scmp.ne.s32.totalorder %s53, %s67
      %p69 = scmp.eq.s32.totalorder %s22, 0
      %p70 = por %p68, %p69
      %s72 = sadd.s32 %s71, 1
      %p75 = scmp.eq.s32.totalorder %s16, 1
      %p76 = scmp.ne.s32.totalorder %s71, %s73
      %p77 = scmp.eq.s32.totalorder %s16, 0
      %p78 = por %p76, %p77
      %p79 = scmp.ne.s32.totalorder %s71, %s73
      %p80 = scmp.eq.s32.totalorder %s21, 1
      %p81 = por %p79, %p80
      %p82 = scmp.ne.s32.totalorder %s73, %s74
      %p83 = scmp.eq.s32.totalorder %s21, 0
      %p84 = por %p82, %p83
      %p85 = scmp.ne.s32.totalorder %s73, %s74
      %p86 = scmp.eq.s32.totalorder %s22, 1
      %p87 = por %p85, %p86
      %p89 = scmp.ne.s32.totalorder %s74, %s88
      %p90 = scmp.eq.s32.totalorder %s22, 0
      %p91 = por %p89, %p90
      %s92 = ssub.s32 %s16, %s23
      %p93 = scmp.eq.s32.totalorder %s92, 0
      %s95 = sadd.s32 %s94, 1
      %s96 = scalar_select %p93, %s94, %s95
      %p99 = pneg %p93
      %p100 = scmp.eq.s32.totalorder %s16, 1
      %p101 = por %p99, %p100
      %p102 = scmp.ne.s32.totalorder %s94, %s97
      %p103 = scmp.eq.s32.totalorder %s16, 0
      %p104 = por %p102, %p103
      %p105 = scmp.ne.s32.totalorder %s94, %s97
      %p106 = scmp.eq.s32.totalorder %s21, 1
      %p107 = por %p105, %p106
      %p108 = scmp.ne.s32.totalorder %s97, %s98
      %p109 = scmp.eq.s32.totalorder %s21, 0
      %p110 = por %p108, %p109
      %p111 = scmp.ne.s32.totalorder %s97, %s98
      %p112 = scmp.eq.s32.totalorder %s22, 1
      %p113 = por %p111, %p112
      %p115 = scmp.ne.s32.totalorder %s98, %s114
      %p116 = scmp.eq.s32.totalorder %s22, 0
      %p117 = por %p115, %p116
      %p118 = scmp.le.s32.totalorder 1, %s16
      %p119 = scmp.lt.s32.totalorder %s16, 3
      %p120 = pnand %p118, %p119
      %p121 = pneg %p120
      // Predicated region
      $region9: #{tpu_custom_call.1} parent=5 // pred_check
        _
      $region10: #{tpu_custom_call.1} parent=5 // pred_check_branch
        %123 = sbr.rel (%p120) target = $region12
      $region11: #{tpu_custom_call.1} parent=5 // pred_region
        %s124 = ssub.s32 %s16, 1
        // Predicated region
        $region13: #{tpu_custom_call.1} parent=11 // pred_check
          %p125 = pneg %p63
        $region14: #{tpu_custom_call.1} parent=11 // pred_check_branch
          %127 = sbr.rel (%p125) target = $region16
        $region15: #{tpu_custom_call.1} parent=11 // pred_region
          %s129 = ssub.s32 64, 64
          %130 = vsyncadd [#allocation6], %s129
          %s132 = sshll.u32 [#allocation5], 4
          %s133 = int_to_ptr.vmem [resolvable:$true] %s132
          %135 = dma.hbm_to_vmem [thread:$0]  %s1, 64, %s133, [#allocation6]
        $region16: #{tpu_custom_call.1} parent=11 // pred_fallthru
          _
        // Predicated region
        $region17: #{tpu_custom_call.1} parent=11 // pred_check
          %p136 = pneg %p84
        $region18: #{tpu_custom_call.1} parent=11 // pred_check_branch
          %138 = sbr.rel (%p136) target = $region20
        $region19: #{tpu_custom_call.1} parent=11 // pred_region
          _
        $region20: #{tpu_custom_call.1} parent=11 // pred_fallthru
          _
      $region12: #{tpu_custom_call.1} parent=5 // pred_fallthru
        _
      %p139 = scmp.lt.s32.totalorder %s16, 2
      // Predicated region
      $region21: #{tpu_custom_call.1} parent=5 // pred_check
        %p140 = pneg %p139
      $region22: #{tpu_custom_call.1} parent=5 // pred_check_branch
        %142 = sbr.rel (%p140) target = $region24
      $region23: #{tpu_custom_call.1} parent=5 // pred_region
        // Predicated region
        $region25: #{tpu_custom_call.1} parent=23 // pred_check
          %p143 = pneg %p36
        $region26: #{tpu_custom_call.1} parent=23 // pred_check_branch
          %145 = sbr.rel (%p143) target = $region28
        $region27: #{tpu_custom_call.1} parent=23 // pred_region
          %s146 = sand.u32 %s26, 1
          %s147 = scalar_lea.sflag [#allocation3], %s146
          %s148 = sand.u32 %s26, 1
          %s149 = smul.addr %s148, 64
          %s150 = scalar_lea.vmem [#allocation2], %s149
          %s152 = ssub.s32 1024, 1024
          %153 = vsyncadd %s147, %s152
          %s154 = smul.addr %s16, 8
          %s155 = smul.addr %s154, 128
          %s156 = scalar_lea.hbm %s0, %s155
          %s157 = sshll.u32 %s150, 4
          %s158 = int_to_ptr.vmem [resolvable:$true] %s157
          %163 = dma.hbm_to_vmem [thread:$0]  %s156, 1024, %s158, %s147, 128, 128, 8
        $region28: #{tpu_custom_call.1} parent=23 // pred_fallthru
          _
      $region24: #{tpu_custom_call.1} parent=5 // pred_fallthru
        _
      %p164 = scmp.le.s32.totalorder 1, %s16
      %p165 = scmp.lt.s32.totalorder %s16, 3
      %p166 = pnand %p164, %p165
      %p167 = pneg %p166
      // Predicated region
      $region29: #{tpu_custom_call.1} parent=5 // pred_check
        _
      $region30: #{tpu_custom_call.1} parent=5 // pred_check_branch
        %169 = sbr.rel (%p166) target = $region32
      $region31: #{tpu_custom_call.1} parent=5 // pred_region
        %s170 = ssub.s32 %s16, 1
        %s171 = sand.u32 %s29, 1
        %s172 = scalar_lea.sflag [#allocation3], %s171
        %s173 = sand.u32 %s29, 1
        %s174 = smul.addr %s173, 64
        %s175 = scalar_lea.vmem [#allocation2], %s174
        // Predicated region
        $region33: #{tpu_custom_call.1} parent=31 // pred_check
          %p176 = pneg %p42
        $region34: #{tpu_custom_call.1} parent=31 // pred_check_branch
          %178 = sbr.rel (%p176) target = $region36
        $region35: #{tpu_custom_call.1} parent=31 // pred_region
          %179 = dma.done %s172, 1024
        $region36: #{tpu_custom_call.1} parent=31 // pred_fallthru
          _
        // Predicated region
        $region37: #{tpu_custom_call.1} parent=31 // pred_check
          %p180 = pneg %p63
        $region38: #{tpu_custom_call.1} parent=31 // pred_check_branch
          %182 = sbr.rel (%p180) target = $region40
        $region39: #{tpu_custom_call.1} parent=31 // pred_region
          %183 = dma.done [#allocation6], 64
        $region40: #{tpu_custom_call.1} parent=31 // pred_fallthru
          _
        %s184 = sand.u32 %s29, 1
        %s185 = scalar_lea.sflag [#allocation3], %s184
        %s186 = sand.u32 %s29, 1
        %s187 = smul.addr %s186, 64
        %s188 = scalar_lea.vmem [#allocation2], %s187
        %p189 = pneg %p42
        %p190 = pneg %p39
        %p191 = pneg %p63
        %p192 = pneg %p60
        %p193 = pneg %p84
        %p194 = pneg %p81
        %p195 = pneg %p110
        %p196 = pneg %p107
        %s197 = sand.u32 %s97, 1
        %s198 = scalar_lea.sflag [#allocation4], %s197
        %s199 = sand.u32 %s97, 1
        %s200 = smul.addr %s199, 128
        %s201 = scalar_lea.vmem [#allocation7], %s200
        %v203 = vld [vmem:[%s175] sm:$0xff]
        %v204 = vld [vmem:[%s175 + $0x8] sm:$0xff]
        %v205 = vld [vmem:[%s175 + $0x10] sm:$0xff]
        %v206 = vld [vmem:[%s175 + $0x18] sm:$0xff]
        %v207 = vld [vmem:[%s175 + $0x20] sm:$0xff]
        %v208 = vld [vmem:[%s175 + $0x28] sm:$0xff]
        %v209 = vld [vmem:[%s175 + $0x30] sm:$0xff]
        %v210 = vld [vmem:[%s175 + $0x38] sm:$0xff]
        %v211 = vpack.c.bf16 %v204, %v203
        %v212 = vpack.c.bf16 %v206, %v205
        %v213 = vpack.c.bf16 %v208, %v207
        %v214 = vpack.c.bf16 %v210, %v209
        %v215 = vld [vmem:[#allocation5] sm:$0xf]
        %v216 = vld [vmem:[%s2] sm:$0x1]
        %v218 = vlaneseq
        %v219 = vshrl.u32 %v218, 7
        %v220 = vsub.s32 0, %v219
        %v221 = vrot.slane %v216, %v220
        %vm223 = vcmask 64512
        %v225 = vsel %vm223, %v211, 0
        %v228 = vsel %vm223, %v212, 0
        %v231 = vsel %vm223, %v213, 0
        %v234 = vsel %vm223, %v214, 0
        %vm236 = vcmask 1043456
        %v238 = vsel %vm236, %v215, 0
        %240 = vmatprep.subr.bf16.mxu0 0
        %241 = vmatpush1.bf16.msra.mxu0 %v238
        %242 = vmatprep.subr.bf16.mxu0 0
        %243 = vmatpush1.bf16.msra.mxu0 0
        %244 = vmatprep.subr.bf16.mxu0 0
        %245 = vmatpush1.bf16.msra.mxu0 0
        %246 = vmatprep.subr.bf16.mxu0 0
        %247 = vmatpush1.bf16.msra.mxu0 0
        %248 = vmatprep.subr.bf16.mxu0 0
        %249 = vmatpush1.bf16.msra.mxu0 0
        %250 = vmatprep.subr.bf16.mxu0 0
        %251 = vmatpush1.bf16.msra.mxu0 0
        %252 = vmatprep.subr.bf16.mxu0 0
        %253 = vmatpush1.bf16.msra.mxu0 0
        %254 = vmatprep.subr.bf16.mxu0 0
        %255 = vmatpush1.bf16.msra.mxu0 0
        %256 = vmatprep.subr.bf16.mxu0 0
        %257 = vmatpush1.bf16.msra.mxu0 0
        %258 = vmatprep.subr.bf16.mxu0 0
        %259 = vmatpush1.bf16.msra.mxu0 0
        %260 = vmatprep.subr.bf16.mxu0 0
        %261 = vmatpush1.bf16.msra.mxu0 0
        %262 = vmatprep.subr.bf16.mxu0 0
        %263 = vmatpush1.bf16.msra.mxu0 0
        %264 = vmatprep.subr.bf16.mxu0 0
        %265 = vmatpush1.bf16.msra.mxu0 0
        %266 = vmatprep.subr.bf16.mxu0 0
        %267 = vmatpush1.bf16.msra.mxu0 0
        %268 = vmatprep.subr.bf16.mxu0 0
        %269 = vmatpush1.bf16.msra.mxu0 0
        %270 = vmatprep.subr.bf16.mxu0 0
        %271 = vmatpush1.bf16.msra.mxu0 0
        %272 = vmatprep.mubr.bf16.mxu0 0
        %273 = vmatmul.mubr.bf16.gmra.mrb[0].mxu0 %v225
        %v274 = vpop.f32.mrb[0].mxu0
        %v275 = vadd.f32 %v221, %v274
        %v276 = vpop.f32.mrb[0].mxu0
        %v277 = vpop.f32.mrb[0].mxu0
        %v278 = vadd.f32 %v221, %v277
        %v279 = vpop.f32.mrb[0].mxu0
        %280 = vmatprep.mubr.bf16.mxu0 0
        %281 = vmatmul.mubr.bf16.gmra.mrb[0].mxu0 %v228
        %v282 = vpop.f32.mrb[0].mxu0
        %v283 = vadd.f32 %v221, %v282
        %v284 = vpop.f32.mrb[0].mxu0
        %v285 = vpop.f32.mrb[0].mxu0
        %v286 = vadd.f32 %v221, %v285
        %v287 = vpop.f32.mrb[0].mxu0
        %288 = vmatprep.mubr.bf16.mxu0 0
        %289 = vmatmul.mubr.bf16.gmra.mrb[0].mxu0 %v231
        %v290 = vpop.f32.mrb[0].mxu0
        %v291 = vadd.f32 %v221, %v290
        %v292 = vpop.f32.mrb[0].mxu0
        %v293 = vpop.f32.mrb[0].mxu0
        %v294 = vadd.f32 %v221, %v293
        %v295 = vpop.f32.mrb[0].mxu0
        %296 = vmatprep.mubr.bf16.mxu0 0
        %297 = vmatmul.mubr.bf16.gmra.mrb[0].mxu0 %v234
        %v298 = vpop.f32.mrb[0].mxu0
        %v299 = vadd.f32 %v221, %v298
        %v300 = vpop.f32.mrb[0].mxu0
        %v301 = vpop.f32.mrb[0].mxu0
        %v302 = vadd.f32 %v221, %v301
        %v303 = vpop.f32.mrb[0].mxu0
        %304 = vdwg.mxu0
        %vm305 = vcmask 130048
        %306 = vst.msk [vmem:[%s201] sm:$0xff] %vm305, %v275
        %307 = vst.msk [vmem:[%s201 + $0x10] sm:$0xff] %vm305, %v278
        %308 = vst.msk [vmem:[%s201 + $0x20] sm:$0xff] %vm305, %v283
        %309 = vst.msk [vmem:[%s201 + $0x30] sm:$0xff] %vm305, %v286
        %310 = vst.msk [vmem:[%s201 + $0x40] sm:$0xff] %vm305, %v291
        %311 = vst.msk [vmem:[%s201 + $0x50] sm:$0xff] %vm305, %v294
        %312 = vst.msk [vmem:[%s201 + $0x60] sm:$0xff] %vm305, %v299
        %313 = vst.msk [vmem:[%s201 + $0x70] sm:$0xff] %vm305, %v302
        %322 = vrot.lane.b32.xlu0 %v275, 112
        %v323 = vpop.permute.xlu0 %322
        %324 = vrot.lane.b32.xlu0 %v278, 112
        %v325 = vpop.permute.xlu0 %324
        %326 = vrot.lane.b32.xlu0 %v283, 112
        %v327 = vpop.permute.xlu0 %326
        %328 = vrot.lane.b32.xlu0 %v286, 112
        %v329 = vpop.permute.xlu0 %328
        %330 = vrot.lane.b32.xlu0 %v291, 112
        %v331 = vpop.permute.xlu0 %330
        %332 = vrot.lane.b32.xlu0 %v294, 112
        %v333 = vpop.permute.xlu0 %332
        %334 = vrot.lane.b32.xlu0 %v299, 112
        %v335 = vpop.permute.xlu0 %334
        %336 = vrot.lane.b32.xlu0 %v302, 112
        %v337 = vpop.permute.xlu0 %336
        %s346 = scalar_lea.vmem %s201, 8 [#allocation7]
        %347 = vst.msk [vmem:[%s346] sm:$0xff] %vm305, %v323
        %348 = vst.msk [vmem:[%s346 + $0x10] sm:$0xff] %vm305, %v325
        %349 = vst.msk [vmem:[%s346 + $0x20] sm:$0xff] %vm305, %v327
        %350 = vst.msk [vmem:[%s346 + $0x30] sm:$0xff] %vm305, %v329
        %351 = vst.msk [vmem:[%s346 + $0x40] sm:$0xff] %vm305, %v331
        %352 = vst.msk [vmem:[%s346 + $0x50] sm:$0xff] %vm305, %v333
        %353 = vst.msk [vmem:[%s346 + $0x60] sm:$0xff] %vm305, %v335
        %354 = vst.msk [vmem:[%s346 + $0x70] sm:$0xff] %vm305, %v337
        %s355 = sand.u32 %s97, 1
        %s356 = scalar_lea.sflag [#allocation4], %s355
        %s357 = sand.u32 %s97, 1
        %s358 = smul.addr %s357, 128
        %s359 = scalar_lea.vmem [#allocation7], %s358
        // Predicated region
        $region41: #{tpu_custom_call.1} parent=31 // pred_check
          %p360 = pneg %p107
        $region42: #{tpu_custom_call.1} parent=31 // pred_check_branch
          %362 = sbr.rel (%p360) target = $region44
        $region43: #{tpu_custom_call.1} parent=31 // pred_region
          %s364 = ssub.s32 2048, 2048
          %365 = vsyncadd %s356, %s364
          %s366 = smul.addr %s21, 16
          %s367 = smul.addr %s366, 128
          %s368 = scalar_lea.hbm %s3, %s367
          %s369 = sshll.u32 %s359, 4
          %s370 = int_to_ptr.vmem [resolvable:$true] %s369
          %375 = dma.vmem_to_hbm [thread:$0]  %s370, 2048, %s368, %s356, 128, 128, 8
        $region44: #{tpu_custom_call.1} parent=31 // pred_fallthru
          _
      $region32: #{tpu_custom_call.1} parent=5 // pred_fallthru
        _
      %p376 = scmp.le.s32.totalorder 2, %s16
      // Predicated region
      $region45: #{tpu_custom_call.1} parent=5 // pred_check
        %p377 = pneg %p376
      $region46: #{tpu_custom_call.1} parent=5 // pred_check_branch
        %379 = sbr.rel (%p377) target = $region48
      $region47: #{tpu_custom_call.1} parent=5 // pred_region
        %s380 = ssub.s32 %s16, 2
        // Predicated region
        $region49: #{tpu_custom_call.1} parent=47 // pred_check
          %p381 = pneg %p113
        $region50: #{tpu_custom_call.1} parent=47 // pred_check_branch
          %383 = sbr.rel (%p381) target = $region52
        $region51: #{tpu_custom_call.1} parent=47 // pred_region
          %s384 = sand.u32 %s98, 1
          %s385 = scalar_lea.sflag [#allocation4], %s384
          %s386 = sand.u32 %s98, 1
          %s387 = smul.addr %s386, 128
          %s388 = scalar_lea.vmem [#allocation7], %s387
          %389 = dma.done %s385, 2048
        $region52: #{tpu_custom_call.1} parent=47 // pred_fallthru
          _
      $region48: #{tpu_custom_call.1} parent=5 // pred_fallthru
        _
    $region6: #{tpu_custom_call.1} parent=1 // loop_footer
      %s20 = sadd.s32 1, %s16
    $region7: #{tpu_custom_call.1} parent=1 // loop_footer_branch
      %15 = sbr.rel target = $region3
    $region8: #{tpu_custom_call.1} parent=1 // loop_exit
      _
    %390 = vsyncpa [#allocation3], 1
    %s391 = scalar_lea.sflag [#allocation3], 1
    %392 = vsyncpa %s391, 1
    %393 = vsyncpa [#allocation6], 1
    %394 = vsyncpa [#allocation4], 1
    %s395 = scalar_lea.sflag [#allocation4], 1
    %396 = vsyncpa %s395, 1

</llo_original>
